<compile_context>
chip_gen: v5e
topology: v5e:2x2
jax: 0.10.0
libtpu: 0.0.40
codegen_flags: <defaults>
</compile_context>

<pallas_src>
import functools

import jax
import jax.numpy as jnp
from jax.experimental import pallas as pl
from jax.experimental.pallas import tpu as pltpu


def _round_up(n, m):
    return ((n + m - 1) // m) * m


def _compute_tb(B, block_b):
    # Keep >= 2 grid steps when B allows (so the "parallel" axis can shard across
    # both TensorCores on v7x) and keep TB a multiple of 8 sublanes.
    half = _round_up(max(pl.cdiv(B, 2), 8), 8)
    return max(8, min(_round_up(block_b, 8), half))


def fm_kernel(ui_ref, rv_ref, ur_ref, w_ui_ref, w_rv_ref, w_ur_ref,
              mask_ref, b_ref, o_ref):
    # ui_ref:   (TB, 2D)      bf16  streamed batch tile (gathered user|item vecs)
    # rv_ref:   (TB, 50)      f32   streamed review tile
    # ur_ref:   (TB, 50)      f32   streamed ui_review tile
    # w_*_ref:  (2, rows,128) bf16  [0] = [V_seg | w_seg^T | 0...], [1] = [0.5*V_seg^2 | 0...]
    # mask_ref: (2, 128)      f32   row 0 = 0.5 on FM cols, row 1 = 1.0 on linear col
    # b_ref:    (1, 1)        f32   bias (SMEM)
    # o_ref:    (TB, 1)       f32
    ui = ui_ref[...]                               # bf16
    rv = rv_ref[...].astype(jnp.bfloat16)          # cast once for the MXU
    ur = ur_ref[...].astype(jnp.bfloat16)

    # x @ [V | w | 0]  accumulated over row-segments (f32 accumulation on the MXU).
    inter1 = jnp.dot(ui, w_ui_ref[0], preferred_element_type=jnp.float32)
    inter1 = inter1 + jnp.dot(rv, w_rv_ref[0], preferred_element_type=jnp.float32)
    inter1 = inter1 + jnp.dot(ur, w_ur_ref[0], preferred_element_type=jnp.float32)

    # (x*x) @ [0.5*V^2 | 0]  -- square directly in bf16 (native bf16 VPU on v6e/v7x).
    inter2 = jnp.dot(ui * ui, w_ui_ref[1], preferred_element_type=jnp.float32)
    inter2 = inter2 + jnp.dot(rv * rv, w_rv_ref[1], preferred_element_type=jnp.float32)
    inter2 = inter2 + jnp.dot(ur * ur, w_ur_ref[1], preferred_element_type=jnp.float32)

    m = mask_ref[...]                              # (2, 128) f32
    mask_fm = m[0:1, :]                            # 0.5 on FM columns, 0 elsewhere
    mask_lin = m[1:2, :]                           # 1.0 on the linear column, 0 elsewhere
    # FM cols j:  0.5*inter1_j^2 - 0.5*(x^2)@(V_j^2) ; linear col: x@w ; other cols: 0.
    contrib = inter1 * inter1 * mask_fm + inter1 * mask_lin - inter2
    o_ref[...] = jnp.sum(contrib, axis=1, keepdims=True) + b_ref[0, 0]


def fm_layer_pallas(ui_x, review, ui_review, w_ui, w_rv, w_ur, mask, bias,
                    *, block_b=4096):
    """ui_x: (B, 2D) bf16, review/ui_review: (B, R) f32, w_*: (2, rows, 128) bf16,
    mask: (2, 128) f32, bias: (1, 1) f32  ->  (B, 1) f32."""
    B, D2 = ui_x.shape
    R = review.shape[1]
    TB = _compute_tb(B, block_b)
    grid = (pl.cdiv(B, TB),)

    flops = 4 * B * (D2 + 2 * R) * 128                      # six (TB,Kseg)x(Kseg,128) matmuls
    bytes_accessed = (B * (D2 * 2 + 2 * R * 4)               # streamed batch pieces
                      + (w_ui.size + w_rv.size + w_ur.size) * 2
                      + B * 4)                               # output

    # NOTE(v5e): if profiling shows exposed DMA on the review streams, add
    # pipeline_mode=pl.Buffered(3) to those BlockSpecs; depth 2 suffices on v6e/v7x.
    return pl.pallas_call(
        fm_kernel,
        out_shape=jax.ShapeDtypeStruct((B, 1), jnp.float32),
        grid=grid,
        in_specs=[
            pl.BlockSpec((TB, D2), lambda i: (i, 0)),                # ui_x: streamed
            pl.BlockSpec((TB, R), lambda i: (i, 0)),                 # review: streamed
            pl.BlockSpec((TB, R), lambda i: (i, 0)),                 # ui_review: streamed
            pl.BlockSpec((2, D2, 128), lambda i: (0, 0, 0)),         # weights: VMEM-resident
            pl.BlockSpec((2, R, 128), lambda i: (0, 0, 0)),
            pl.BlockSpec((2, R, 128), lambda i: (0, 0, 0)),
            pl.BlockSpec((2, 128), lambda i: (0, 0)),                # lane masks: VMEM-resident
            pl.BlockSpec((1, 1), lambda i: (0, 0),
                         memory_space=pltpu.MemorySpace.SMEM),       # bias scalar
        ],
        out_specs=pl.BlockSpec((TB, 1), lambda i: (i, 0)),
        compiler_params=pltpu.CompilerParams(
            dimension_semantics=("parallel",),
            vmem_limit_bytes=48 * 1024 * 1024,   # ~15 MiB used at TB=4096; headroom, < v7x 64 MiB physical
        ),
        cost_estimate=pl.CostEstimate(
            flops=flops, transcendentals=0, bytes_accessed=bytes_accessed),
    )(ui_x, review, ui_review, w_ui, w_rv, w_ur, mask, bias)


class FmReviewUIPallas:
    """JAX/Pallas port of FmReviewUI (discrete=False path)."""

    KP = 128  # lane-padded factor width of the packed RHS

    def __init__(self, u_id_len, i_id_len, id_embedding_dim, key, block_b=4096):
        k1, k2, k3, k4, k5 = jax.random.split(key, 5)
        d2 = id_embedding_dim * 2
        p = d2 + 50 * 2
        self.p = p
        self.d2 = d2
        self.k = 10
        self.block_b = block_b

        self.user_emb = jax.random.normal(k1, (u_id_len, id_embedding_dim), jnp.float32) * 0.1
        self.item_emb = jax.random.normal(k2, (i_id_len, id_embedding_dim), jnp.float32) * 0.1
        # nn.Linear(p, 1): weight (1, p), bias (1,)
        self.w_lin = jax.random.normal(k3, (1, p), jnp.float32) * 0.05
        self.b_lin = jax.random.normal(k4, (), jnp.float32) * 0.05
        # self.v is torch.zeros in __init__; use small deterministic values so the
        # interaction term is exercised (synthetic weights, not a checkpoint).
        self.v = jax.random.normal(k5, (p, self.k), jnp.float32) * 0.05

        # Packed, TPU-aligned weights, built ONCE at init, split by x row-segment:
        #   [0] = [V_seg | w_seg^T | 0...]   (V itself NOT rescaled -> rounding untouched)
        #   [1] = [0.5 * V_seg^2 | 0 ...]    (0.5 of the pair term folded here)
        def pack(v_seg, w_seg):
            rows = v_seg.shape[0]
            rhs1 = (jnp.zeros((rows, self.KP), jnp.float32)
                    .at[:, :self.k].set(v_seg)
                    .at[:, self.k].set(w_seg))
            rhs2 = (jnp.zeros((rows, self.KP), jnp.float32)
                    .at[:, :self.k].set(0.5 * v_seg * v_seg))
            return jnp.stack([rhs1, rhs2]).astype(jnp.bfloat16)

        self.w_ui = pack(self.v[:d2], self.w_lin[0, :d2])                  # (2, 2D, 128)
        self.w_rv = pack(self.v[d2:d2 + 50], self.w_lin[0, d2:d2 + 50])    # (2, 50, 128)
        self.w_ur = pack(self.v[d2 + 50:], self.w_lin[0, d2 + 50:])        # (2, 50, 128)

        # Lane masks: row 0 selects (and x0.5) the FM columns, row 1 the linear column.
        mask = jnp.zeros((2, self.KP), jnp.float32)
        self.mask = mask.at[0, :self.k].set(0.5).at[1, self.k].set(1.0)
        self.bias = jnp.full((1, 1), self.b_lin, jnp.float32)

    @functools.partial(jax.jit, static_argnums=0)
    def __call__(self, u_id, i_id, review, ui_review):
        # Only the tiny (B, 2D) gathered slice is materialized; review / ui_review
        # stream straight from their original HBM buffers into the kernel, so the
        # full concatenated x (B, 132) is never written to / re-read from HBM.
        u_vec = jnp.take(self.user_emb, u_id, axis=0)        # (B, D)
        i_vec = jnp.take(self.item_emb, i_id, axis=0)        # (B, D)
        ui_x = jnp.concatenate([u_vec, i_vec], axis=1).astype(jnp.bfloat16)   # (B, 2D)
        return fm_layer_pallas(ui_x, review, ui_review,
                               self.w_ui, self.w_rv, self.w_ur,
                               self.mask, self.bias, block_b=self.block_b)    # (B, 1) f32


def _reference(model, u_id, i_id, review, ui_review):
    u_vec = jnp.take(model.user_emb, u_id, axis=0)
    i_vec = jnp.take(model.item_emb, i_id, axis=0)
    x = jnp.concatenate([u_vec, i_vec, review, ui_review], axis=1)
    linear = x @ model.w_lin.T + model.b_lin
    inter1 = x @ model.v
    inter2 = (x * x) @ (model.v * model.v)
    pair = jnp.sum(inter1 * inter1 - inter2, axis=1, keepdims=True)
    return linear + 0.5 * pair


if __name__ == "__main__":
    key = jax.random.PRNGKey(0)
    u_id_len, i_id_len, id_embedding_dim = 20, 30, 16

    # --- Test 1: tiny batch (single, partial tile) ---
    k_model, k_u, k_i, k_r1, k_r2, key = jax.random.split(key, 6)
    B = 4
    model = FmReviewUIPallas(u_id_len, i_id_len, id_embedding_dim, k_model)
    u_id = jax.random.randint(k_u, (B,), 0, u_id_len)
    i_id = jax.random.randint(k_i, (B,), 0, i_id_len)
    review = jax.random.normal(k_r1, (B, 50), jnp.float32)
    ui_review = jax.random.normal(k_r2, (B, 50), jnp.float32)

    out = jax.block_until_ready(model(u_id, i_id, review, ui_review))
    ref = _reference(model, u_id, i_id, review, ui_review)
    assert out.shape == (B, 1)
    # bf16 MXU operands with f32 accumulation -> slightly looser tolerance vs the f32 reference.
    assert jnp.allclose(out, ref, atol=5e-2, rtol=5e-2)

    # --- Test 2: multi-tile grid with a partial last tile (B=37, TB=16 -> 3 tiles) ---
    k_model2, k_u2, k_i2, k_r3, k_r4, key = jax.random.split(key, 6)
    B2 = 37
    model2 = FmReviewUIPallas(u_id_len, i_id_len, id_embedding_dim, k_model2, block_b=16)
    u_id2 = jax.random.randint(k_u2, (B2,), 0, u_id_len)
    i_id2 = jax.random.randint(k_i2, (B2,), 0, i_id_len)
    review2 = jax.random.normal(k_r3, (B2, 50), jnp.float32)
    ui_review2 = jax.random.normal(k_r4, (B2, 50), jnp.float32)

    out2 = jax.block_until_ready(model2(u_id2, i_id2, review2, ui_review2))
    ref2 = _reference(model2, u_id2, i_id2, review2, ui_review2)
    assert out2.shape == (B2, 1)
    assert jnp.allclose(out2, ref2, atol=5e-2, rtol=5e-2)

    print("KERNEL_OK")
</pallas_src>

<mosaic_0001>
module attributes {stable_mosaic.version = 11 : i64} {
  func.func @fm_kernel(%arg0: i32, %arg1: memref<8x32xbf16, #tpu.memory_space<vmem>>, %arg2: memref<8x50xf32, #tpu.memory_space<vmem>>, %arg3: memref<8x50xf32, #tpu.memory_space<vmem>>, %arg4: memref<2x32x128xbf16, #tpu.memory_space<vmem>>, %arg5: memref<2x50x128xbf16, #tpu.memory_space<vmem>>, %arg6: memref<2x50x128xbf16, #tpu.memory_space<vmem>>, %arg7: memref<2x128xf32, #tpu.memory_space<vmem>>, %arg8: memref<1x1xf32, #tpu.memory_space<smem>>, %arg9: memref<8x1xf32, #tpu.memory_space<vmem>>) attributes {dimension_semantics = [#tpu.dimension_semantics<parallel>], iteration_bounds = array<i64: 1>, scalar_prefetch = 0 : i64, scratch_operands = 0 : i64, tpu.core_type = #tpu.core_type<tc>, window_params = [{transform_indices = @transform_0, window_bounds = array<i64: 8, 32>}, {transform_indices = @transform_1, window_bounds = array<i64: 8, 50>}, {transform_indices = @transform_2, window_bounds = array<i64: 8, 50>}, {pipeline_mode = #tpu.pipeline_mode<synchronous>, transform_indices = @transform_3, window_bounds = array<i64: 2, 32, 128>}, {pipeline_mode = #tpu.pipeline_mode<synchronous>, transform_indices = @transform_4, window_bounds = array<i64: 2, 50, 128>}, {pipeline_mode = #tpu.pipeline_mode<synchronous>, transform_indices = @transform_5, window_bounds = array<i64: 2, 50, 128>}, {pipeline_mode = #tpu.pipeline_mode<synchronous>, transform_indices = @transform_6, window_bounds = array<i64: 2, 128>}, {transform_indices = @transform_7, window_bounds = array<i64: 1, 1>}, {transform_indices = @transform_8, window_bounds = array<i64: 8, 1>}]} {
    %c0 = arith.constant 0 : index
    %c0_0 = arith.constant 0 : index
    %0 = vector.load %arg1[%c0, %c0_0] : memref<8x32xbf16, #tpu.memory_space<vmem>>, vector<8x32xbf16>
    %c0_1 = arith.constant 0 : index
    %c0_2 = arith.constant 0 : index
    %1 = vector.load %arg2[%c0_1, %c0_2] : memref<8x50xf32, #tpu.memory_space<vmem>>, vector<8x50xf32>
    %2 = arith.truncf %1 : vector<8x50xf32> to vector<8x50xbf16>
    %c0_3 = arith.constant 0 : index
    %c0_4 = arith.constant 0 : index
    %3 = vector.load %arg3[%c0_3, %c0_4] : memref<8x50xf32, #tpu.memory_space<vmem>>, vector<8x50xf32>
    %4 = arith.truncf %3 : vector<8x50xf32> to vector<8x50xbf16>
    %c0_5 = arith.constant 0 : index
    %c0_6 = arith.constant 0 : index
    %c0_7 = arith.constant 0 : index
    %5 = vector.load %arg4[%c0_5, %c0_6, %c0_7] : memref<2x32x128xbf16, #tpu.memory_space<vmem>>, vector<1x32x128xbf16>
    %6 = vector.shape_cast %5 : vector<1x32x128xbf16> to vector<32x128xbf16>
    %cst = arith.constant dense<0.000000e+00> : vector<8x128xf32>
    %7 = tpu.matmul %0, %6, %cst {dimension_numbers = #tpu.dot_dimension_numbers<[1], [0], [0], [1], [0, 0, 1, 1], [], []>} : vector<8x32xbf16>, vector<32x128xbf16>, vector<8x128xf32> -> vector<8x128xf32>
    %c0_8 = arith.constant 0 : index
    %c0_9 = arith.constant 0 : index
    %c0_10 = arith.constant 0 : index
    %8 = vector.load %arg5[%c0_8, %c0_9, %c0_10] : memref<2x50x128xbf16, #tpu.memory_space<vmem>>, vector<1x50x128xbf16>
    %9 = vector.shape_cast %8 : vector<1x50x128xbf16> to vector<50x128xbf16>
    %cst_11 = arith.constant dense<0.000000e+00> : vector<8x128xf32>
    %10 = tpu.matmul %2, %9, %cst_11 {dimension_numbers = #tpu.dot_dimension_numbers<[1], [0], [0], [1], [0, 0, 1, 1], [], []>} : vector<8x50xbf16>, vector<50x128xbf16>, vector<8x128xf32> -> vector<8x128xf32>
    %11 = arith.addf %7, %10 : vector<8x128xf32>
    %c0_12 = arith.constant 0 : index
    %c0_13 = arith.constant 0 : index
    %c0_14 = arith.constant 0 : index
    %12 = vector.load %arg6[%c0_12, %c0_13, %c0_14] : memref<2x50x128xbf16, #tpu.memory_space<vmem>>, vector<1x50x128xbf16>
    %13 = vector.shape_cast %12 : vector<1x50x128xbf16> to vector<50x128xbf16>
    %cst_15 = arith.constant dense<0.000000e+00> : vector<8x128xf32>
    %14 = tpu.matmul %4, %13, %cst_15 {dimension_numbers = #tpu.dot_dimension_numbers<[1], [0], [0], [1], [0, 0, 1, 1], [], []>} : vector<8x50xbf16>, vector<50x128xbf16>, vector<8x128xf32> -> vector<8x128xf32>
    %15 = arith.addf %11, %14 : vector<8x128xf32>
    %16 = arith.mulf %0, %0 : vector<8x32xbf16>
    %c1 = arith.constant 1 : index
    %c0_16 = arith.constant 0 : index
    %c0_17 = arith.constant 0 : index
    %17 = vector.load %arg4[%c1, %c0_16, %c0_17] : memref<2x32x128xbf16, #tpu.memory_space<vmem>>, vector<1x32x128xbf16>
    %18 = vector.shape_cast %17 : vector<1x32x128xbf16> to vector<32x128xbf16>
    %cst_18 = arith.constant dense<0.000000e+00> : vector<8x128xf32>
    %19 = tpu.matmul %16, %18, %cst_18 {dimension_numbers = #tpu.dot_dimension_numbers<[1], [0], [0], [1], [0, 0, 1, 1], [], []>} : vector<8x32xbf16>, vector<32x128xbf16>, vector<8x128xf32> -> vector<8x128xf32>
    %20 = arith.mulf %2, %2 : vector<8x50xbf16>
    %c1_19 = arith.constant 1 : index
    %c0_20 = arith.constant 0 : index
    %c0_21 = arith.constant 0 : index
    %21 = vector.load %arg5[%c1_19, %c0_20, %c0_21] : memref<2x50x128xbf16, #tpu.memory_space<vmem>>, vector<1x50x128xbf16>
    %22 = vector.shape_cast %21 : vector<1x50x128xbf16> to vector<50x128xbf16>
    %cst_22 = arith.constant dense<0.000000e+00> : vector<8x128xf32>
    %23 = tpu.matmul %20, %22, %cst_22 {dimension_numbers = #tpu.dot_dimension_numbers<[1], [0], [0], [1], [0, 0, 1, 1], [], []>} : vector<8x50xbf16>, vector<50x128xbf16>, vector<8x128xf32> -> vector<8x128xf32>
    %24 = arith.addf %19, %23 : vector<8x128xf32>
    %25 = arith.mulf %4, %4 : vector<8x50xbf16>
    %c1_23 = arith.constant 1 : index
    %c0_24 = arith.constant 0 : index
    %c0_25 = arith.constant 0 : index
    %26 = vector.load %arg6[%c1_23, %c0_24, %c0_25] : memref<2x50x128xbf16, #tpu.memory_space<vmem>>, vector<1x50x128xbf16>
    %27 = vector.shape_cast %26 : vector<1x50x128xbf16> to vector<50x128xbf16>
    %cst_26 = arith.constant dense<0.000000e+00> : vector<8x128xf32>
    %28 = tpu.matmul %25, %27, %cst_26 {dimension_numbers = #tpu.dot_dimension_numbers<[1], [0], [0], [1], [0, 0, 1, 1], [], []>} : vector<8x50xbf16>, vector<50x128xbf16>, vector<8x128xf32> -> vector<8x128xf32>
    %29 = arith.addf %24, %28 : vector<8x128xf32>
    %c0_27 = arith.constant 0 : index
    %c0_28 = arith.constant 0 : index
    %30 = vector.load %arg7[%c0_27, %c0_28] : memref<2x128xf32, #tpu.memory_space<vmem>>, vector<2x128xf32>
    %31 = vector.extract_strided_slice %30 {offsets = [0, 0], sizes = [1, 128], strides = [1, 1]} : vector<2x128xf32> to vector<1x128xf32>
    %32 = vector.extract_strided_slice %30 {offsets = [1, 0], sizes = [1, 128], strides = [1, 1]} : vector<2x128xf32> to vector<1x128xf32>
    %33 = arith.mulf %15, %15 : vector<8x128xf32>
    %34 = vector.broadcast %31 : vector<1x128xf32> to vector<8x128xf32>
    %35 = arith.mulf %33, %34 : vector<8x128xf32>
    %36 = vector.broadcast %32 : vector<1x128xf32> to vector<8x128xf32>
    %37 = arith.mulf %15, %36 : vector<8x128xf32>
    %38 = arith.addf %35, %37 : vector<8x128xf32>
    %39 = arith.subf %38, %29 : vector<8x128xf32>
    %cst_29 = arith.constant dense<0.000000e+00> : vector<8xf32>
    %40 = vector.multi_reduction <add>, %39, %cst_29 [1] : vector<8x128xf32> to vector<8xf32>
    %41 = vector.shape_cast %40 : vector<8xf32> to vector<8x1xf32>
    %c0_30 = arith.constant 0 : index
    %c0_31 = arith.constant 0 : index
    %42 = memref.load %arg8[%c0_30, %c0_31] : memref<1x1xf32, #tpu.memory_space<smem>>
    %43 = vector.broadcast %42 : f32 to vector<8x1xf32>
    %44 = arith.addf %41, %43 : vector<8x1xf32>
    %c0_32 = arith.constant 0 : index
    %c0_33 = arith.constant 0 : index
    %45 = vector.load %arg9[%c0_32, %c0_33] : memref<8x1xf32, #tpu.memory_space<vmem>>, vector<8x1xf32>
    tpu.vector_store %arg9[%c0_32, %c0_33], %44 {strides = array<i32>} : memref<8x1xf32, #tpu.memory_space<vmem>>, vector<8x1xf32>,
    return
  }
  func.func @transform_0(%arg0: i32) -> (i32, i32) {
    %c0_i32 = arith.constant 0 : i32
    %c0_i32_0 = arith.constant 0 : i32
    return %arg0, %c0_i32 : i32, i32
  }
  func.func @transform_1(%arg0: i32) -> (i32, i32) {
    %c0_i32 = arith.constant 0 : i32
    %c0_i32_0 = arith.constant 0 : i32
    return %arg0, %c0_i32 : i32, i32
  }
  func.func @transform_2(%arg0: i32) -> (i32, i32) {
    %c0_i32 = arith.constant 0 : i32
    %c0_i32_0 = arith.constant 0 : i32
    return %arg0, %c0_i32 : i32, i32
  }
  func.func @transform_3(%arg0: i32) -> (i32, i32, i32) {
    %c0_i32 = arith.constant 0 : i32
    %c0_i32_0 = arith.constant 0 : i32
    %c0_i32_1 = arith.constant 0 : i32
    %c0_i32_2 = arith.constant 0 : i32
    return %c0_i32, %c0_i32_0, %c0_i32_1 : i32, i32, i32
  }
  func.func @transform_4(%arg0: i32) -> (i32, i32, i32) {
    %c0_i32 = arith.constant 0 : i32
    %c0_i32_0 = arith.constant 0 : i32
    %c0_i32_1 = arith.constant 0 : i32
    %c0_i32_2 = arith.constant 0 : i32
    return %c0_i32, %c0_i32_0, %c0_i32_1 : i32, i32, i32
  }
  func.func @transform_5(%arg0: i32) -> (i32, i32, i32) {
    %c0_i32 = arith.constant 0 : i32
    %c0_i32_0 = arith.constant 0 : i32
    %c0_i32_1 = arith.constant 0 : i32
    %c0_i32_2 = arith.constant 0 : i32
    return %c0_i32, %c0_i32_0, %c0_i32_1 : i32, i32, i32
  }
  func.func @transform_6(%arg0: i32) -> (i32, i32) {
    %c0_i32 = arith.constant 0 : i32
    %c0_i32_0 = arith.constant 0 : i32
    %c0_i32_1 = arith.constant 0 : i32
    return %c0_i32, %c0_i32_0 : i32, i32
  }
  func.func @transform_7(%arg0: i32) -> (i32, i32) {
    %c0_i32 = arith.constant 0 : i32
    %c0_i32_0 = arith.constant 0 : i32
    %c0_i32_1 = arith.constant 0 : i32
    return %c0_i32, %c0_i32_0 : i32, i32
  }
  func.func @transform_8(%arg0: i32) -> (i32, i32) {
    %c0_i32 = arith.constant 0 : i32
    %c0_i32_0 = arith.constant 0 : i32
    return %arg0, %c0_i32 : i32, i32
  }
}

</mosaic_0001>

<llo_original>
// kernel: a_call__.1
$region0: #{a_call__.1}
  #allocation0 [shape = 'u32[]', space=smem, size = 0x4, offset = 0x4, fixed_abs, tag = 'smem constant byte address 0x4 - core index']
  #allocation1 [shape = 'u32[72,128]{1,0:T(1,128)}', space=vmem, size = 0x9000, scoped, tag = 'internal scratch']
  #allocation2 [shape = 'f32[1,1]{1,0:T(1,128)S(6)}', space=smem, size = 0x200, scoped, tag = 'scoped memory for a_call__.1']
  %s0 = inlined_call_operand.vmem [shape: bf16[4,32], index: 0, kind: input, shape index: {}]
  %s1 = inlined_call_operand.vmem [shape: f32[4,50], index: 1, kind: input, shape index: {}]
  %s2 = inlined_call_operand.hbm [shape: f32[4,50], index: 2, kind: input, shape index: {}]
  %s3 = inlined_call_operand.hbm [shape: bf16[2,32,128], index: 3, kind: input, shape index: {}]
  %s4 = inlined_call_operand.vmem [shape: bf16[2,50,128], index: 4, kind: input, shape index: {}]
  %s5 = inlined_call_operand.hbm [shape: bf16[2,50,128], index: 5, kind: input, shape index: {}]
  %s6 = inlined_call_operand.hbm [shape: f32[2,128], index: 6, kind: input, shape index: {}]
  %s7 = inlined_call_operand.<no memory space> [shape: f32[1,1], index: 7, kind: input, shape index: {}]
  %s8 = inlined_call_operand.vmem [shape: f32[4,1], index: 8, kind: output, shape index: {}]
  %s9 = sld [smem:[#allocation0]]
  $region88: #{a_call__.1} parent=0
    _
  %s11 = ssub.s32 1, %s9
  %s12 = scalar_select 0, %s11, %s9
  %13 = sst [smem:[#allocation2]] %s7
  $region1: #{a_call__.1} parent=0
    #allocation3 [shape = 'u8[4096]{0}', space=vmem, size = 0x1000, scoped, tag = 'input window, operand 2, single buffered']
    #allocation4 [shape = 's32[1]{0}', space=sflag, size = 0x4, scoped, tag = 'scoped memory for a_call__.1']
    #allocation5 [shape = 'u8[16384]{0}', space=vmem, size = 0x4000, scoped, tag = 'input window, operand 3, single buffered']
    #allocation6 [shape = 's32[1]{0}', space=sflag, size = 0x4, scoped, tag = 'scoped memory for a_call__.1']
    #allocation7 [shape = 'u8[28672]{0}', space=vmem, size = 0x7000, scoped, tag = 'input window, operand 5, single buffered']
    #allocation8 [shape = 'u8[1024]{0}', space=vmem, size = 0x400, scoped, tag = 'input window, operand 6, single buffered']
    #allocation9 [shape = 's32[1]{0}', space=sflag, size = 0x4, scoped, tag = 'scoped memory for a_call__.1']
    #allocation10 [shape = 'u8[4096]{0}', space=vmem, size = 0x1000, scoped, tag = 'output window, operand 0, single buffered']
    %14 = vsyncpa [#allocation4], 0
    %15 = vsyncpa [#allocation6], 0
    %16 = vsyncpa [#allocation9], 0
    // Predicated region
    $region2: #{a_call__.1} parent=1 // pred_check
      _
    $region3: #{a_call__.1} parent=1 // pred_check_branch
      %18 = sbr.rel (0) target = $region5
    $region4: #{a_call__.1} parent=1 // pred_region
      _
    $region5: #{a_call__.1} parent=1 // pred_fallthru
      _
    // Predicated region
    $region6: #{a_call__.1} parent=1 // pred_check
      _
    $region7: #{a_call__.1} parent=1 // pred_check_branch
      %20 = sbr.rel (0) target = $region9
    $region8: #{a_call__.1} parent=1 // pred_region
      _
    $region9: #{a_call__.1} parent=1 // pred_fallthru
      _
    // Predicated region
    $region10: #{a_call__.1} parent=1 // pred_check
      _
    $region11: #{a_call__.1} parent=1 // pred_check_branch
      %22 = sbr.rel (0) target = $region13
    $region12: #{a_call__.1} parent=1 // pred_region
      %24 = vsyncadd [#allocation4], 64
      %s25 = sshll.u32 %s2, 4
      %s26 = int_to_ptr.hbm [resolvable:$true] %s25
      %s27 = sshll.u32 [#allocation3], 4
      %s28 = int_to_ptr.vmem [resolvable:$true] %s27
      %33 = dma.hbm_to_vmem [thread:$0]  %s26, 64, %s28, [#allocation4], 64, 64, 4
    $region13: #{a_call__.1} parent=1 // pred_fallthru
      _
    // Predicated region
    $region14: #{a_call__.1} parent=1 // pred_check
      _
    $region15: #{a_call__.1} parent=1 // pred_check_branch
      %35 = sbr.rel (0) target = $region17
    $region16: #{a_call__.1} parent=1 // pred_region
      %37 = vsyncadd [#allocation6], 0
      %s38 = sshll.u32 %s3, 4
      %s39 = int_to_ptr.hbm [resolvable:$true] %s38
      %s40 = sshll.u32 [#allocation5], 4
      %s41 = int_to_ptr.vmem [resolvable:$true] %s40
      %46 = dma.hbm_to_vmem [thread:$0]  %s39, 512, %s41, [#allocation6], 64, 64, 4
    $region17: #{a_call__.1} parent=1 // pred_fallthru
      _
    // Predicated region
    $region18: #{a_call__.1} parent=1 // pred_check
      _
    $region19: #{a_call__.1} parent=1 // pred_check_branch
      %48 = sbr.rel (0) target = $region21
    $region20: #{a_call__.1} parent=1 // pred_region
      _
    $region21: #{a_call__.1} parent=1 // pred_fallthru
      _
    // Predicated region
    $region22: #{a_call__.1} parent=1 // pred_check
      _
    $region23: #{a_call__.1} parent=1 // pred_check_branch
      %50 = sbr.rel (0) target = $region25
    $region24: #{a_call__.1} parent=1 // pred_region
      %52 = vsyncadd [#allocation6], 0
      %s53 = sshll.u32 %s5, 4
      %s54 = int_to_ptr.hbm [resolvable:$true] %s53
      %s55 = sshll.u32 [#allocation7], 4
      %s56 = int_to_ptr.vmem [resolvable:$true] %s55
      %61 = dma.hbm_to_vmem [thread:$0]  %s54, 896, %s56, [#allocation6], 64, 64, 4
    $region25: #{a_call__.1} parent=1 // pred_fallthru
      _
    // Predicated region
    $region26: #{a_call__.1} parent=1 // pred_check
      _
    $region27: #{a_call__.1} parent=1 // pred_check_branch
      %63 = sbr.rel (0) target = $region29
    $region28: #{a_call__.1} parent=1 // pred_region
      %65 = vsyncadd [#allocation9], 0
      %s67 = sshll.u32 %s6, 4
      %s68 = int_to_ptr.hbm [resolvable:$true] %s67
      %s69 = sshll.u32 [#allocation8], 4
      %s70 = int_to_ptr.vmem [resolvable:$true] %s69
      %72 = dma.hbm_to_vmem [thread:$0]  %s68, 32, %s70, [#allocation9]
    $region29: #{a_call__.1} parent=1 // pred_fallthru
      _
    // Predicated region
    $region30: #{a_call__.1} parent=1 // pred_check
      _
    $region31: #{a_call__.1} parent=1 // pred_check_branch
      %74 = sbr.rel (0) target = $region33
    $region32: #{a_call__.1} parent=1 // pred_region
      _
    $region33: #{a_call__.1} parent=1 // pred_fallthru
      _
    // Predicated region
    $region34: #{a_call__.1} parent=1 // pred_check
      _
    $region35: #{a_call__.1} parent=1 // pred_check_branch
      %76 = sbr.rel (0) target = $region37
    $region36: #{a_call__.1} parent=1 // pred_region
      %78 = dma.done [#allocation4], 128
    $region37: #{a_call__.1} parent=1 // pred_fallthru
      _
    // Predicated region
    $region38: #{a_call__.1} parent=1 // pred_check
      _
    $region39: #{a_call__.1} parent=1 // pred_check_branch
      %80 = sbr.rel (0) target = $region41
    $region40: #{a_call__.1} parent=1 // pred_region
      %82 = dma.done [#allocation6], 512
    $region41: #{a_call__.1} parent=1 // pred_fallthru
      _
    // Predicated region
    $region42: #{a_call__.1} parent=1 // pred_check
      _
    $region43: #{a_call__.1} parent=1 // pred_check_branch
      %84 = sbr.rel (0) target = $region45
    $region44: #{a_call__.1} parent=1 // pred_region
      %86 = dma.done [#allocation6], 896
    $region45: #{a_call__.1} parent=1 // pred_fallthru
      _
    // Predicated region
    $region46: #{a_call__.1} parent=1 // pred_check
      _
    $region47: #{a_call__.1} parent=1 // pred_check_branch
      %88 = sbr.rel (0) target = $region49
    $region48: #{a_call__.1} parent=1 // pred_region
      %90 = dma.done [#allocation9], 32
    $region49: #{a_call__.1} parent=1 // pred_fallthru
      _
    %v92 = vld [vmem:[%s0] sm:$0x3]
    %v93 = vld [vmem:[%s0 + $0x2] sm:$0x3]
    %v94 = vld [vmem:[%s1] sm:$0xff]
    %v95 = vpack.c.bf16 %v94, %v94
    %v96 = vld [vmem:[#allocation3] sm:$0xff]
    %v97 = vpack.c.bf16 %v96, %v96
    %v98 = vld [vmem:[#allocation5] sm:$0xf]
    %v99 = vld [vmem:[#allocation5 + $0x4] sm:$0xf]
    %v100 = vld [vmem:[#allocation5 + $0x8] sm:$0xf]
    %v101 = vld [vmem:[#allocation5 + $0xc] sm:$0xf]
    %v102 = vld [vmem:[%s4] sm:$0xf]
    %v103 = vld [vmem:[%s4 + $0x4] sm:$0xf]
    %v104 = vld [vmem:[%s4 + $0x8] sm:$0xf]
    %v105 = vld [vmem:[%s4 + $0xc] sm:$0xf]
    %v106 = vld [vmem:[%s4 + $0x10] sm:$0xf]
    %v107 = vld [vmem:[%s4 + $0x14] sm:$0xf]
    %v108 = vld [vmem:[%s4 + $0x18] sm:$0x1]
    %v116 = vunpack.c.l.b16 %v102
    %v117 = vunpack.c.l.b16 %v103
    %v118 = vunpack.c.l.b16 %v104
    %v119 = vunpack.c.l.b16 %v105
    %v120 = vunpack.c.l.b16 %v106
    %v121 = vunpack.c.l.b16 %v107
    %v122 = vunpack.c.l.b16 %v108
    %v123 = vpack.c.b16 %v117, %v116
    %v124 = vpack.c.b16 %v119, %v118
    %v125 = vpack.c.b16 %v121, %v120
    %v126 = vpack.c.b16 %v122, %v122
    %vm130 = vcmask 408576
    %v132 = vsel %vm130, %v95, 0
    %vm134 = vcmask 1040384
    %v136 = vsel %vm134, %v126, 0
    %138 = vmatpush.bf16.msra.mxu0 0
    %139 = vmatpush.bf16.msra.mxu0 0
    %140 = vmatpush.bf16.msra.mxu0 0
    %141 = vmatpush.bf16.msra.mxu0 0
    %142 = vmatpush.bf16.msra.mxu0 %v136
    %143 = vmatpush.bf16.msra.mxu0 %v125
    %144 = vmatpush.bf16.msra.mxu0 %v124
    %145 = vmatpush.bf16.msra.mxu0 %v123
    %146 = vmatmul.bf16.gmra.mxu0 %v132
    %v147 = vpop.f32.mrf.mxu0
    %v148 = vadd.f32 0.0, %v147
    %v149 = vpop.f32.mrf.mxu0
    %150 = vdwg.mxu0
    %152 = vst [vmem:[#allocation1] ss:$4 sm:$0xff] %v92
    %s154 = scalar_lea.vmem [#allocation1], 1
    %155 = vst [vmem:[%s154] ss:$4 sm:$0xff] %v93
    %v156 = vld.sshfl [vmem:[#allocation1] sm:$0xff pattern:$0x73625140]
    %v161 = vunpack.c.l.b16 %v98
    %v162 = vunpack.c.l.b16 %v99
    %v163 = vunpack.c.l.b16 %v100
    %v164 = vunpack.c.l.b16 %v101
    %v165 = vpack.c.b16 %v162, %v161
    %v166 = vpack.c.b16 %v164, %v163
    %vm169 = vcmask 261120
    %v170 = vsel %vm169, %v156, 0
    %172 = vmatpush.bf16.msra.mxu0 0
    %173 = vmatpush.bf16.msra.mxu0 0
    %174 = vmatpush.bf16.msra.mxu0 0
    %175 = vmatpush.bf16.msra.mxu0 0
    %176 = vmatpush.bf16.msra.mxu0 0
    %177 = vmatpush.bf16.msra.mxu0 0
    %178 = vmatpush.bf16.msra.mxu0 %v166
    %179 = vmatpush.bf16.msra.mxu0 %v165
    %180 = vmatmul.bf16.gmra.mxu0 %v170
    %v181 = vpop.f32.mrf.mxu0
    %v182 = vadd.f32 %v148, %v181
    %v183 = vpop.f32.mrf.mxu0
    %184 = vdwg.mxu0
    %v185 = vld [vmem:[#allocation7] sm:$0xf]
    %v186 = vld [vmem:[#allocation7 + $0x4] sm:$0xf]
    %v187 = vld [vmem:[#allocation7 + $0x8] sm:$0xf]
    %v188 = vld [vmem:[#allocation7 + $0xc] sm:$0xf]
    %v189 = vld [vmem:[#allocation7 + $0x10] sm:$0xf]
    %v190 = vld [vmem:[#allocation7 + $0x14] sm:$0xf]
    %v191 = vld [vmem:[#allocation7 + $0x18] sm:$0x1]
    %v199 = vunpack.c.l.b16 %v185
    %v200 = vunpack.c.l.b16 %v186
    %v201 = vunpack.c.l.b16 %v187
    %v202 = vunpack.c.l.b16 %v188
    %v203 = vunpack.c.l.b16 %v189
    %v204 = vunpack.c.l.b16 %v190
    %v205 = vunpack.c.l.b16 %v191
    %v206 = vpack.c.b16 %v200, %v199
    %v207 = vpack.c.b16 %v202, %v201
    %v208 = vpack.c.b16 %v204, %v203
    %v209 = vpack.c.b16 %v205, %v205
    %v214 = vsel %vm130, %v97, 0
    %v217 = vsel %vm134, %v209, 0
    %219 = vmatpush.bf16.msra.mxu0 0
    %220 = vmatpush.bf16.msra.mxu0 0
    %221 = vmatpush.bf16.msra.mxu0 0
    %222 = vmatpush.bf16.msra.mxu0 0
    %223 = vmatpush.bf16.msra.mxu0 %v217
    %224 = vmatpush.bf16.msra.mxu0 %v208
    %225 = vmatpush.bf16.msra.mxu0 %v207
    %226 = vmatpush.bf16.msra.mxu0 %v206
    %227 = vmatmul.bf16.gmra.mxu0 %v214
    %v228 = vpop.f32.mrf.mxu0
    %v229 = vadd.f32 0.0, %v228
    %v230 = vpop.f32.mrf.mxu0
    %231 = vdwg.mxu0
    %v232 = vadd.f32 %v182, %v229
    %v233 = vunpack.c.l.bf16 %v92
    %v234 = vunpack.c.l.bf16 %v93
    %v235 = vmul.f32 %v233, %v233
    %v236 = vmul.f32 %v234, %v234
    %239 = vst [vmem:[#allocation1] ss:$2 sm:$0xff] %v235
    %s240 = scalar_lea.vmem [#allocation1], 1
    %241 = vst [vmem:[%s240] ss:$2 sm:$0xff] %v236
    %v242 = vld.sshfl [vmem:[#allocation1] sm:$0xff pattern:$0x75316420]
    %v244 = vpack.c.bf16 %v242, %v242
    %s245 = scalar_lea.vmem [#allocation5], 16
    %v246 = vld [vmem:[%s245] sm:$0xf]
    %v247 = vld [vmem:[%s245 + $0x4] sm:$0xf]
    %v248 = vld [vmem:[%s245 + $0x8] sm:$0xf]
    %v249 = vld [vmem:[%s245 + $0xc] sm:$0xf]
    %v250 = vunpack.c.l.bf16 %v95
    %v251 = vmul.f32 %v250, %v250
    %v252 = vpack.c.bf16 %v251, %v251
    %s253 = scalar_lea.vmem %s4, 28
    %v254 = vld [vmem:[%s253] sm:$0xf]
    %v255 = vld [vmem:[%s253 + $0x4] sm:$0xf]
    %v256 = vld [vmem:[%s253 + $0x8] sm:$0xf]
    %v257 = vld [vmem:[%s253 + $0xc] sm:$0xf]
    %v258 = vld [vmem:[%s253 + $0x10] sm:$0xf]
    %v259 = vld [vmem:[%s253 + $0x14] sm:$0xf]
    %v260 = vld [vmem:[%s253 + $0x18] sm:$0x1]
    %v268 = vunpack.c.l.b16 %v254
    %v269 = vunpack.c.l.b16 %v255
    %v270 = vunpack.c.l.b16 %v256
    %v271 = vunpack.c.l.b16 %v257
    %v272 = vunpack.c.l.b16 %v258
    %v273 = vunpack.c.l.b16 %v259
    %v274 = vunpack.c.l.b16 %v260
    %v275 = vpack.c.b16 %v269, %v268
    %v276 = vpack.c.b16 %v271, %v270
    %v277 = vpack.c.b16 %v273, %v272
    %v278 = vpack.c.b16 %v274, %v274
    %v283 = vsel %vm130, %v252, 0
    %v286 = vsel %vm134, %v278, 0
    %288 = vmatpush.bf16.msra.mxu0 0
    %289 = vmatpush.bf16.msra.mxu0 0
    %290 = vmatpush.bf16.msra.mxu0 0
    %291 = vmatpush.bf16.msra.mxu0 0
    %292 = vmatpush.bf16.msra.mxu0 %v286
    %293 = vmatpush.bf16.msra.mxu0 %v277
    %294 = vmatpush.bf16.msra.mxu0 %v276
    %295 = vmatpush.bf16.msra.mxu0 %v275
    %296 = vmatmul.bf16.gmra.mxu0 %v283
    %v297 = vpop.f32.mrf.mxu0
    %v298 = vadd.f32 0.0, %v297
    %v299 = vpop.f32.mrf.mxu0
    %300 = vdwg.mxu0
    %v305 = vunpack.c.l.b16 %v246
    %v306 = vunpack.c.l.b16 %v247
    %v307 = vunpack.c.l.b16 %v248
    %v308 = vunpack.c.l.b16 %v249
    %v309 = vpack.c.b16 %v306, %v305
    %v310 = vpack.c.b16 %v308, %v307
    %v314 = vsel %vm169, %v244, 0
    %316 = vmatpush.bf16.msra.mxu0 0
    %317 = vmatpush.bf16.msra.mxu0 0
    %318 = vmatpush.bf16.msra.mxu0 0
    %319 = vmatpush.bf16.msra.mxu0 0
    %320 = vmatpush.bf16.msra.mxu0 0
    %321 = vmatpush.bf16.msra.mxu0 0
    %322 = vmatpush.bf16.msra.mxu0 %v310
    %323 = vmatpush.bf16.msra.mxu0 %v309
    %324 = vmatmul.bf16.gmra.mxu0 %v314
    %v325 = vpop.f32.mrf.mxu0
    %v326 = vadd.f32 %v298, %v325
    %v327 = vpop.f32.mrf.mxu0
    %328 = vdwg.mxu0
    %v329 = vunpack.c.l.bf16 %v97
    %v330 = vmul.f32 %v329, %v329
    %v331 = vpack.c.bf16 %v330, %v330
    %s332 = scalar_lea.vmem [#allocation7], 28
    %v333 = vld [vmem:[%s332] sm:$0xf]
    %v334 = vld [vmem:[%s332 + $0x4] sm:$0xf]
    %v335 = vld [vmem:[%s332 + $0x8] sm:$0xf]
    %v336 = vld [vmem:[%s332 + $0xc] sm:$0xf]
    %v337 = vld [vmem:[%s332 + $0x10] sm:$0xf]
    %v338 = vld [vmem:[%s332 + $0x14] sm:$0xf]
    %v339 = vld [vmem:[%s332 + $0x18] sm:$0x1]
    %v347 = vunpack.c.l.b16 %v333
    %v348 = vunpack.c.l.b16 %v334
    %v349 = vunpack.c.l.b16 %v335
    %v350 = vunpack.c.l.b16 %v336
    %v351 = vunpack.c.l.b16 %v337
    %v352 = vunpack.c.l.b16 %v338
    %v353 = vunpack.c.l.b16 %v339
    %v354 = vpack.c.b16 %v348, %v347
    %v355 = vpack.c.b16 %v350, %v349
    %v356 = vpack.c.b16 %v352, %v351
    %v357 = vpack.c.b16 %v353, %v353
    %v362 = vsel %vm130, %v331, 0
    %v365 = vsel %vm134, %v357, 0
    %367 = vmatpush.bf16.msra.mxu0 0
    %368 = vmatpush.bf16.msra.mxu0 0
    %369 = vmatpush.bf16.msra.mxu0 0
    %370 = vmatpush.bf16.msra.mxu0 0
    %371 = vmatpush.bf16.msra.mxu0 %v365
    %372 = vmatpush.bf16.msra.mxu0 %v356
    %373 = vmatpush.bf16.msra.mxu0 %v355
    %374 = vmatpush.bf16.msra.mxu0 %v354
    %375 = vmatmul.bf16.gmra.mxu0 %v362
    %v376 = vpop.f32.mrf.mxu0
    %v377 = vadd.f32 0.0, %v376
    %v378 = vpop.f32.mrf.mxu0
    %379 = vdwg.mxu0
    %v380 = vadd.f32 %v326, %v377
    %v381 = vld [vmem:[#allocation8] sm:$0x3]
    %v382 = vmul.f32 %v232, %v232
    %v383 = vperm.slane %v381, 0
    %v384 = vmul.f32 %v382, %v383
    %v385 = vperm.slane %v381, 1
    %v386 = vmul.f32 %v232, %v385
    %v387 = vadd.f32 %v384, %v386
    %v388 = vsub.f32 %v387, %v380
    %389 = vadd.xlane.f32.xlu0 %v388
    %v390 = vpop.xlane.xlu0 %389
    %s391 = sld [smem:[#allocation2]]
    %v392 = vstv %s391
    %v393 = vadd.f32 %v390, %v392
    %vm394 = vcmask 7168
    %395 = vst.msk [vmem:[#allocation10] sm:$0xff] %vm394, %v393
    // Predicated region
    $region50: #{a_call__.1} parent=1 // pred_check
      _
    $region51: #{a_call__.1} parent=1 // pred_check_branch
      %397 = sbr.rel (0) target = $region53
    $region52: #{a_call__.1} parent=1 // pred_region
      // Predicated region
      $region54: #{a_call__.1} parent=52 // pred_check
        _
      $region55: #{a_call__.1} parent=52 // pred_check_branch
        %399 = sbr.rel (0) target = $region57
      $region56: #{a_call__.1} parent=52 // pred_region
        // Predicated region
        $region58: #{a_call__.1} parent=56 // pred_check
          _
        $region59: #{a_call__.1} parent=56 // pred_check_branch
          %401 = sbr.rel target = $region61
        $region60: #{a_call__.1} parent=56 // pred_region
          // Predicated region
          $region73: #{a_call__.1} parent=60 // pred_check
            _
          $region74: #{a_call__.1} parent=60 // pred_check_branch
            %417 = sbr.rel (0) target = $region76
          $region75: #{a_call__.1} parent=60 // pred_region
            %s419 = ssub.s32 16, 1
            loop: start=0, step=1, limit=1
            $region77: #{a_call__.1} parent=75 // loop_pre_header
              _
            $region78: #{a_call__.1} parent=75 // loop_header
              %s421 = sphi 0, %s425
              %p422 = scmp.ge.s32.totalorder %s421, 1
              %s426 = sphi [#allocation10], [#allocation10]
              %s427 = sphi %s8, %s8
            $region79: #{a_call__.1} parent=75 // loop_header_branch
              %424 = sbr.rel (%p422) target = $region83
            $region80: #{a_call__.1} parent=75 // loop_body
              %v428 = vld [vmem:[%s426] sm:%s419]
              %429 = vst [vmem:[%s427] sm:%s419] %v428
            $region81: #{a_call__.1} parent=75 // loop_footer
              %s425 = sadd.s32 1, %s421
            $region82: #{a_call__.1} parent=75 // loop_footer_branch
              %420 = sbr.rel target = $region78
            $region83: #{a_call__.1} parent=75 // loop_exit
              _
          $region76: #{a_call__.1} parent=60 // pred_fallthru
            _
        $region61: #{a_call__.1} parent=56 // pred_fallthru
          _
        // Predicated region
        $region62: #{a_call__.1} parent=56 // pred_check
          _
        $region63: #{a_call__.1} parent=56 // pred_check_branch
          %403 = sbr.rel (0) target = $region65
        $region64: #{a_call__.1} parent=56 // pred_region
          %s405 = ssub.s32 16, 1
          loop: start=0, step=1, limit=1
          $region66: #{a_call__.1} parent=64 // loop_pre_header
            _
          $region67: #{a_call__.1} parent=64 // loop_header
            %s407 = sphi 0, %s411
            %p408 = scmp.ge.s32.totalorder %s407, 1
            %s412 = sphi [#allocation10], [#allocation10]
            %s413 = sphi %s8, %s8
          $region68: #{a_call__.1} parent=64 // loop_header_branch
            %410 = sbr.rel (%p408) target = $region72
          $region69: #{a_call__.1} parent=64 // loop_body
            %v414 = vld [vmem:[%s412] sm:%s405]
            %415 = vst [vmem:[%s413] sm:%s405] %v414
          $region70: #{a_call__.1} parent=64 // loop_footer
            %s411 = sadd.s32 1, %s407
          $region71: #{a_call__.1} parent=64 // loop_footer_branch
            %406 = sbr.rel target = $region67
          $region72: #{a_call__.1} parent=64 // loop_exit
            _
        $region65: #{a_call__.1} parent=56 // pred_fallthru
          _
      $region57: #{a_call__.1} parent=52 // pred_fallthru
        _
      %430 = vnop
    $region53: #{a_call__.1} parent=1 // pred_fallthru
      _
    // Predicated region
    $region84: #{a_call__.1} parent=1 // pred_check
      _
    $region85: #{a_call__.1} parent=1 // pred_check_branch
      %432 = sbr.rel (0) target = $region87
    $region86: #{a_call__.1} parent=1 // pred_region
      _
    $region87: #{a_call__.1} parent=1 // pred_fallthru
      _
    %433 = vsyncpa [#allocation4], 1
    %434 = vsyncpa [#allocation6], 1
    %435 = vsyncpa [#allocation9], 1

</llo_original>
